<compile_context>
chip_gen: v5e
topology: v5e:2x2
jax: 0.10.0
libtpu: 0.0.40
codegen_flags: <defaults>
</compile_context>

<pallas_src>
import jax
import jax.numpy as jnp
from jax.experimental import pallas as pl
from jax.experimental.pallas import tpu as pltpu


def lstm_fc_kernel(x_ref, w_ih_ref, w_hh_ref, b_ref, w_fc_ref, b_fc_ref, out_ref):
    # x_ref:    (T*B, I)  time-major, flattened
    # w_ih_ref: (I, 4H)
    # w_hh_ref: (H, 4H)
    # b_ref:    (1, 4H)   b_ih + b_hh (combined)
    # w_fc_ref: (1, H)    fc weight row
    # b_fc_ref: (1, 1)    fc bias (SMEM scalar)
    # out_ref:  (B, 1)
    TB, _ = x_ref.shape
    H = w_hh_ref.shape[0]
    B = out_ref.shape[0]
    T = TB // B

    w_hh = w_hh_ref[...]

    # Hoisted input projection: one streaming MXU matmul for all timesteps,
    # bias folded in once (removes the per-step bias broadcast+add).
    gates_x = (
        jnp.dot(x_ref[...], w_ih_ref[...], preferred_element_type=jnp.float32)
        + b_ref[...]
    )  # (T*B, 4H), f32

    h = jnp.zeros((B, H), jnp.float32)
    c = jnp.zeros((B, H), jnp.float32)

    # Fully unrolled recurrence: t is a Python int, so every gate-slab slice is
    # static and the scheduler sees the whole dependency chain across steps.
    for t in range(T):
        gates = gates_x[t * B:(t + 1) * B, :] + jnp.dot(
            h.astype(w_hh.dtype), w_hh, preferred_element_type=jnp.float32
        )  # (B, 4H)

        # Full-vreg transcendentals (EUP), then static lane slices per gate.
        sig = jax.nn.sigmoid(gates)
        th = jnp.tanh(gates)
        i_g = sig[:, 0 * H:1 * H]
        f_g = sig[:, 1 * H:2 * H]
        g_g = th[:, 2 * H:3 * H]
        o_g = sig[:, 3 * H:4 * H]

        c = f_g * c + i_g * g_g
        h = o_g * jnp.tanh(c)

    # Final Linear(H -> 1): VPU multiply + lane reduction (no N=1 MXU matmul).
    out_ref[...] = (
        jnp.sum(h * w_fc_ref[...], axis=-1, keepdims=True) + b_fc_ref[0, 0]
    )


def lstm_forward(x, params, *, compute_dtype=jnp.float32):
    """x: (B, T, I) float32 (batch_first, matching PyTorch).  Returns (B, 1).

    compute_dtype=jnp.bfloat16 halves VMEM/DMA for x and the 4H-wide weights on
    v6e/v7x (f32 accumulation is kept); default f32 matches PyTorch exactly.
    """
    w_ih, w_hh, b_ih, b_hh, w_fc, b_fc = params
    B, T, I = x.shape
    H = w_hh.shape[1]  # PyTorch w_hh is (4H, H)

    # Pad batch to the f32 sublane tile (8) so the recurrent h @ W_hh matmul
    # feeds at least a full sublane group of MXU rows.  Padded rows are dropped
    # below, so they never leak into the returned output.
    B_pad = max(8, ((B + 7) // 8) * 8)

    x_tm = jnp.transpose(x, (1, 0, 2)).astype(compute_dtype)  # (T, B, I)
    if B_pad != B:
        x_tm = jnp.pad(x_tm, ((0, 0), (0, B_pad - B), (0, 0)))
    x2d = x_tm.reshape(T * B_pad, I)                           # (T*B_pad, I)

    w_ih_t = jnp.transpose(w_ih).astype(compute_dtype)         # (I, 4H)
    w_hh_t = jnp.transpose(w_hh).astype(compute_dtype)         # (H, 4H)
    b = (b_ih + b_hh).reshape(1, 4 * H).astype(jnp.float32)    # (1, 4H)
    w_fc_r = w_fc.reshape(1, H).astype(jnp.float32)            # (1, H)
    b_fc_r = b_fc.reshape(1, 1).astype(jnp.float32)            # (1, 1)

    vmem = pl.BlockSpec(memory_space=pltpu.MemorySpace.VMEM)
    smem = pl.BlockSpec(memory_space=pltpu.MemorySpace.SMEM)

    out = pl.pallas_call(
        lstm_fc_kernel,
        out_shape=jax.ShapeDtypeStruct((B_pad, 1), jnp.float32),
        in_specs=[vmem, vmem, vmem, vmem, vmem, smem],
        out_specs=vmem,
    )(x2d, w_ih_t, w_hh_t, b, w_fc_r, b_fc_r)

    return out[:B]


def init_params(key, input_size, hidden_size):
    """Deterministic init matching PyTorch nn.LSTM / nn.Linear shapes."""
    k = 1.0 / jnp.sqrt(hidden_size)
    keys = jax.random.split(key, 6)
    w_ih = jax.random.uniform(keys[0], (4 * hidden_size, input_size), jnp.float32, -k, k)
    w_hh = jax.random.uniform(keys[1], (4 * hidden_size, hidden_size), jnp.float32, -k, k)
    b_ih = jax.random.uniform(keys[2], (4 * hidden_size,), jnp.float32, -k, k)
    b_hh = jax.random.uniform(keys[3], (4 * hidden_size,), jnp.float32, -k, k)
    w_fc = jax.random.uniform(keys[4], (1, hidden_size), jnp.float32, -k, k)
    b_fc = jax.random.uniform(keys[5], (1,), jnp.float32, -k, k)
    return (w_ih, w_hh, b_ih, b_hh, w_fc, b_fc)


def reference_forward(x, params):
    """Pure-JAX reference replicating PyTorch nn.LSTM (1 layer) + Linear."""
    w_ih, w_hh, b_ih, b_hh, w_fc, b_fc = params
    B, T, _ = x.shape
    H = w_hh.shape[1]
    h = jnp.zeros((B, H), jnp.float32)
    c = jnp.zeros((B, H), jnp.float32)
    for t in range(T):
        gates = x[:, t, :] @ w_ih.T + b_ih + h @ w_hh.T + b_hh
        i = jax.nn.sigmoid(gates[:, 0 * H:1 * H])
        f = jax.nn.sigmoid(gates[:, 1 * H:2 * H])
        g = jnp.tanh(gates[:, 2 * H:3 * H])
        o = jax.nn.sigmoid(gates[:, 3 * H:4 * H])
        c = f * c + i * g
        h = o * jnp.tanh(c)
    return h @ w_fc.T + b_fc


if __name__ == "__main__":
    batch, seq, input_size, hidden_size = 2, 8, 4, 32

    key = jax.random.PRNGKey(0)
    k_x, k_p = jax.random.split(key)
    x = jax.random.normal(k_x, (batch, seq, input_size), jnp.float32)
    params = init_params(k_p, input_size, hidden_size)

    out = lstm_forward(x, params)
    out = jax.block_until_ready(out)

    ref = reference_forward(x, params)
    assert out.shape == (batch, 1)
    assert jnp.allclose(out, ref, atol=1e-5, rtol=1e-5)

    print("KERNEL_OK")
</pallas_src>

<mosaic_0001>
module attributes {stable_mosaic.version = 11 : i64} {
  func.func @lstm_fc_kernel(%arg0: memref<64x4xf32, #tpu.memory_space<vmem>>, %arg1: memref<4x128xf32, #tpu.memory_space<vmem>>, %arg2: memref<32x128xf32, #tpu.memory_space<vmem>>, %arg3: memref<1x128xf32, #tpu.memory_space<vmem>>, %arg4: memref<1x32xf32, #tpu.memory_space<vmem>>, %arg5: memref<1x1xf32, #tpu.memory_space<smem>>, %arg6: memref<8x1xf32, #tpu.memory_space<vmem>>) attributes {dimension_semantics = [], scalar_prefetch = 0 : i64, scratch_operands = 0 : i64, tpu.core_type = #tpu.core_type<tc>} {
    %c0 = arith.constant 0 : index
    %c0_0 = arith.constant 0 : index
    %0 = vector.load %arg2[%c0, %c0_0] : memref<32x128xf32, #tpu.memory_space<vmem>>, vector<32x128xf32>
    %c0_1 = arith.constant 0 : index
    %c0_2 = arith.constant 0 : index
    %1 = vector.load %arg0[%c0_1, %c0_2] : memref<64x4xf32, #tpu.memory_space<vmem>>, vector<64x4xf32>
    %c0_3 = arith.constant 0 : index
    %c0_4 = arith.constant 0 : index
    %2 = vector.load %arg1[%c0_3, %c0_4] : memref<4x128xf32, #tpu.memory_space<vmem>>, vector<4x128xf32>
    %cst = arith.constant dense<0.000000e+00> : vector<64x128xf32>
    %3 = tpu.matmul %1, %2, %cst {dimension_numbers = #tpu.dot_dimension_numbers<[1], [0], [0], [1], [0, 0, 1, 1], [], []>} : vector<64x4xf32>, vector<4x128xf32>, vector<64x128xf32> -> vector<64x128xf32>
    %c0_5 = arith.constant 0 : index
    %c0_6 = arith.constant 0 : index
    %4 = vector.load %arg3[%c0_5, %c0_6] : memref<1x128xf32, #tpu.memory_space<vmem>>, vector<1x128xf32>
    %5 = vector.broadcast %4 : vector<1x128xf32> to vector<64x128xf32>
    %6 = arith.addf %3, %5 : vector<64x128xf32>
    %cst_7 = arith.constant 0.000000e+00 : f32
    %7 = vector.broadcast %cst_7 : f32 to vector<8x32xf32>
    %cst_8 = arith.constant 0.000000e+00 : f32
    %8 = vector.broadcast %cst_8 : f32 to vector<8x32xf32>
    %9 = vector.extract_strided_slice %6 {offsets = [0, 0], sizes = [8, 128], strides = [1, 1]} : vector<64x128xf32> to vector<8x128xf32>
    %cst_9 = arith.constant dense<0.000000e+00> : vector<8x128xf32>
    %10 = tpu.matmul %7, %0, %cst_9 {dimension_numbers = #tpu.dot_dimension_numbers<[1], [0], [0], [1], [0, 0, 1, 1], [], []>} : vector<8x32xf32>, vector<32x128xf32>, vector<8x128xf32> -> vector<8x128xf32>
    %11 = arith.addf %9, %10 : vector<8x128xf32>
    %12 = arith.negf %11 : vector<8x128xf32>
    %13 = math.exp %12 : vector<8x128xf32>
    %cst_10 = arith.constant 1.000000e+00 : f32
    %14 = vector.broadcast %cst_10 : f32 to vector<8x128xf32>
    %15 = arith.addf %14, %13 : vector<8x128xf32>
    %16 = arith.divf %14, %15 : vector<8x128xf32>
    %17 = math.tanh %11 : vector<8x128xf32>
    %18 = vector.extract_strided_slice %16 {offsets = [0, 0], sizes = [8, 32], strides = [1, 1]} : vector<8x128xf32> to vector<8x32xf32>
    %19 = vector.extract_strided_slice %16 {offsets = [0, 32], sizes = [8, 32], strides = [1, 1]} : vector<8x128xf32> to vector<8x32xf32>
    %20 = vector.extract_strided_slice %17 {offsets = [0, 64], sizes = [8, 32], strides = [1, 1]} : vector<8x128xf32> to vector<8x32xf32>
    %21 = vector.extract_strided_slice %16 {offsets = [0, 96], sizes = [8, 32], strides = [1, 1]} : vector<8x128xf32> to vector<8x32xf32>
    %22 = arith.mulf %19, %8 : vector<8x32xf32>
    %23 = arith.mulf %18, %20 : vector<8x32xf32>
    %24 = arith.addf %22, %23 : vector<8x32xf32>
    %25 = math.tanh %24 : vector<8x32xf32>
    %26 = arith.mulf %21, %25 : vector<8x32xf32>
    %27 = vector.extract_strided_slice %6 {offsets = [8, 0], sizes = [8, 128], strides = [1, 1]} : vector<64x128xf32> to vector<8x128xf32>
    %cst_11 = arith.constant dense<0.000000e+00> : vector<8x128xf32>
    %28 = tpu.matmul %26, %0, %cst_11 {dimension_numbers = #tpu.dot_dimension_numbers<[1], [0], [0], [1], [0, 0, 1, 1], [], []>} : vector<8x32xf32>, vector<32x128xf32>, vector<8x128xf32> -> vector<8x128xf32>
    %29 = arith.addf %27, %28 : vector<8x128xf32>
    %30 = arith.negf %29 : vector<8x128xf32>
    %31 = math.exp %30 : vector<8x128xf32>
    %cst_12 = arith.constant 1.000000e+00 : f32
    %32 = vector.broadcast %cst_12 : f32 to vector<8x128xf32>
    %33 = arith.addf %32, %31 : vector<8x128xf32>
    %34 = arith.divf %32, %33 : vector<8x128xf32>
    %35 = math.tanh %29 : vector<8x128xf32>
    %36 = vector.extract_strided_slice %34 {offsets = [0, 0], sizes = [8, 32], strides = [1, 1]} : vector<8x128xf32> to vector<8x32xf32>
    %37 = vector.extract_strided_slice %34 {offsets = [0, 32], sizes = [8, 32], strides = [1, 1]} : vector<8x128xf32> to vector<8x32xf32>
    %38 = vector.extract_strided_slice %35 {offsets = [0, 64], sizes = [8, 32], strides = [1, 1]} : vector<8x128xf32> to vector<8x32xf32>
    %39 = vector.extract_strided_slice %34 {offsets = [0, 96], sizes = [8, 32], strides = [1, 1]} : vector<8x128xf32> to vector<8x32xf32>
    %40 = arith.mulf %37, %24 : vector<8x32xf32>
    %41 = arith.mulf %36, %38 : vector<8x32xf32>
    %42 = arith.addf %40, %41 : vector<8x32xf32>
    %43 = math.tanh %42 : vector<8x32xf32>
    %44 = arith.mulf %39, %43 : vector<8x32xf32>
    %45 = vector.extract_strided_slice %6 {offsets = [16, 0], sizes = [8, 128], strides = [1, 1]} : vector<64x128xf32> to vector<8x128xf32>
    %cst_13 = arith.constant dense<0.000000e+00> : vector<8x128xf32>
    %46 = tpu.matmul %44, %0, %cst_13 {dimension_numbers = #tpu.dot_dimension_numbers<[1], [0], [0], [1], [0, 0, 1, 1], [], []>} : vector<8x32xf32>, vector<32x128xf32>, vector<8x128xf32> -> vector<8x128xf32>
    %47 = arith.addf %45, %46 : vector<8x128xf32>
    %48 = arith.negf %47 : vector<8x128xf32>
    %49 = math.exp %48 : vector<8x128xf32>
    %cst_14 = arith.constant 1.000000e+00 : f32
    %50 = vector.broadcast %cst_14 : f32 to vector<8x128xf32>
    %51 = arith.addf %50, %49 : vector<8x128xf32>
    %52 = arith.divf %50, %51 : vector<8x128xf32>
    %53 = math.tanh %47 : vector<8x128xf32>
    %54 = vector.extract_strided_slice %52 {offsets = [0, 0], sizes = [8, 32], strides = [1, 1]} : vector<8x128xf32> to vector<8x32xf32>
    %55 = vector.extract_strided_slice %52 {offsets = [0, 32], sizes = [8, 32], strides = [1, 1]} : vector<8x128xf32> to vector<8x32xf32>
    %56 = vector.extract_strided_slice %53 {offsets = [0, 64], sizes = [8, 32], strides = [1, 1]} : vector<8x128xf32> to vector<8x32xf32>
    %57 = vector.extract_strided_slice %52 {offsets = [0, 96], sizes = [8, 32], strides = [1, 1]} : vector<8x128xf32> to vector<8x32xf32>
    %58 = arith.mulf %55, %42 : vector<8x32xf32>
    %59 = arith.mulf %54, %56 : vector<8x32xf32>
    %60 = arith.addf %58, %59 : vector<8x32xf32>
    %61 = math.tanh %60 : vector<8x32xf32>
    %62 = arith.mulf %57, %61 : vector<8x32xf32>
    %63 = vector.extract_strided_slice %6 {offsets = [24, 0], sizes = [8, 128], strides = [1, 1]} : vector<64x128xf32> to vector<8x128xf32>
    %cst_15 = arith.constant dense<0.000000e+00> : vector<8x128xf32>
    %64 = tpu.matmul %62, %0, %cst_15 {dimension_numbers = #tpu.dot_dimension_numbers<[1], [0], [0], [1], [0, 0, 1, 1], [], []>} : vector<8x32xf32>, vector<32x128xf32>, vector<8x128xf32> -> vector<8x128xf32>
    %65 = arith.addf %63, %64 : vector<8x128xf32>
    %66 = arith.negf %65 : vector<8x128xf32>
    %67 = math.exp %66 : vector<8x128xf32>
    %cst_16 = arith.constant 1.000000e+00 : f32
    %68 = vector.broadcast %cst_16 : f32 to vector<8x128xf32>
    %69 = arith.addf %68, %67 : vector<8x128xf32>
    %70 = arith.divf %68, %69 : vector<8x128xf32>
    %71 = math.tanh %65 : vector<8x128xf32>
    %72 = vector.extract_strided_slice %70 {offsets = [0, 0], sizes = [8, 32], strides = [1, 1]} : vector<8x128xf32> to vector<8x32xf32>
    %73 = vector.extract_strided_slice %70 {offsets = [0, 32], sizes = [8, 32], strides = [1, 1]} : vector<8x128xf32> to vector<8x32xf32>
    %74 = vector.extract_strided_slice %71 {offsets = [0, 64], sizes = [8, 32], strides = [1, 1]} : vector<8x128xf32> to vector<8x32xf32>
    %75 = vector.extract_strided_slice %70 {offsets = [0, 96], sizes = [8, 32], strides = [1, 1]} : vector<8x128xf32> to vector<8x32xf32>
    %76 = arith.mulf %73, %60 : vector<8x32xf32>
    %77 = arith.mulf %72, %74 : vector<8x32xf32>
    %78 = arith.addf %76, %77 : vector<8x32xf32>
    %79 = math.tanh %78 : vector<8x32xf32>
    %80 = arith.mulf %75, %79 : vector<8x32xf32>
    %81 = vector.extract_strided_slice %6 {offsets = [32, 0], sizes = [8, 128], strides = [1, 1]} : vector<64x128xf32> to vector<8x128xf32>
    %cst_17 = arith.constant dense<0.000000e+00> : vector<8x128xf32>
    %82 = tpu.matmul %80, %0, %cst_17 {dimension_numbers = #tpu.dot_dimension_numbers<[1], [0], [0], [1], [0, 0, 1, 1], [], []>} : vector<8x32xf32>, vector<32x128xf32>, vector<8x128xf32> -> vector<8x128xf32>
    %83 = arith.addf %81, %82 : vector<8x128xf32>
    %84 = arith.negf %83 : vector<8x128xf32>
    %85 = math.exp %84 : vector<8x128xf32>
    %cst_18 = arith.constant 1.000000e+00 : f32
    %86 = vector.broadcast %cst_18 : f32 to vector<8x128xf32>
    %87 = arith.addf %86, %85 : vector<8x128xf32>
    %88 = arith.divf %86, %87 : vector<8x128xf32>
    %89 = math.tanh %83 : vector<8x128xf32>
    %90 = vector.extract_strided_slice %88 {offsets = [0, 0], sizes = [8, 32], strides = [1, 1]} : vector<8x128xf32> to vector<8x32xf32>
    %91 = vector.extract_strided_slice %88 {offsets = [0, 32], sizes = [8, 32], strides = [1, 1]} : vector<8x128xf32> to vector<8x32xf32>
    %92 = vector.extract_strided_slice %89 {offsets = [0, 64], sizes = [8, 32], strides = [1, 1]} : vector<8x128xf32> to vector<8x32xf32>
    %93 = vector.extract_strided_slice %88 {offsets = [0, 96], sizes = [8, 32], strides = [1, 1]} : vector<8x128xf32> to vector<8x32xf32>
    %94 = arith.mulf %91, %78 : vector<8x32xf32>
    %95 = arith.mulf %90, %92 : vector<8x32xf32>
    %96 = arith.addf %94, %95 : vector<8x32xf32>
    %97 = math.tanh %96 : vector<8x32xf32>
    %98 = arith.mulf %93, %97 : vector<8x32xf32>
    %99 = vector.extract_strided_slice %6 {offsets = [40, 0], sizes = [8, 128], strides = [1, 1]} : vector<64x128xf32> to vector<8x128xf32>
    %cst_19 = arith.constant dense<0.000000e+00> : vector<8x128xf32>
    %100 = tpu.matmul %98, %0, %cst_19 {dimension_numbers = #tpu.dot_dimension_numbers<[1], [0], [0], [1], [0, 0, 1, 1], [], []>} : vector<8x32xf32>, vector<32x128xf32>, vector<8x128xf32> -> vector<8x128xf32>
    %101 = arith.addf %99, %100 : vector<8x128xf32>
    %102 = arith.negf %101 : vector<8x128xf32>
    %103 = math.exp %102 : vector<8x128xf32>
    %cst_20 = arith.constant 1.000000e+00 : f32
    %104 = vector.broadcast %cst_20 : f32 to vector<8x128xf32>
    %105 = arith.addf %104, %103 : vector<8x128xf32>
    %106 = arith.divf %104, %105 : vector<8x128xf32>
    %107 = math.tanh %101 : vector<8x128xf32>
    %108 = vector.extract_strided_slice %106 {offsets = [0, 0], sizes = [8, 32], strides = [1, 1]} : vector<8x128xf32> to vector<8x32xf32>
    %109 = vector.extract_strided_slice %106 {offsets = [0, 32], sizes = [8, 32], strides = [1, 1]} : vector<8x128xf32> to vector<8x32xf32>
    %110 = vector.extract_strided_slice %107 {offsets = [0, 64], sizes = [8, 32], strides = [1, 1]} : vector<8x128xf32> to vector<8x32xf32>
    %111 = vector.extract_strided_slice %106 {offsets = [0, 96], sizes = [8, 32], strides = [1, 1]} : vector<8x128xf32> to vector<8x32xf32>
    %112 = arith.mulf %109, %96 : vector<8x32xf32>
    %113 = arith.mulf %108, %110 : vector<8x32xf32>
    %114 = arith.addf %112, %113 : vector<8x32xf32>
    %115 = math.tanh %114 : vector<8x32xf32>
    %116 = arith.mulf %111, %115 : vector<8x32xf32>
    %117 = vector.extract_strided_slice %6 {offsets = [48, 0], sizes = [8, 128], strides = [1, 1]} : vector<64x128xf32> to vector<8x128xf32>
    %cst_21 = arith.constant dense<0.000000e+00> : vector<8x128xf32>
    %118 = tpu.matmul %116, %0, %cst_21 {dimension_numbers = #tpu.dot_dimension_numbers<[1], [0], [0], [1], [0, 0, 1, 1], [], []>} : vector<8x32xf32>, vector<32x128xf32>, vector<8x128xf32> -> vector<8x128xf32>
    %119 = arith.addf %117, %118 : vector<8x128xf32>
    %120 = arith.negf %119 : vector<8x128xf32>
    %121 = math.exp %120 : vector<8x128xf32>
    %cst_22 = arith.constant 1.000000e+00 : f32
    %122 = vector.broadcast %cst_22 : f32 to vector<8x128xf32>
    %123 = arith.addf %122, %121 : vector<8x128xf32>
    %124 = arith.divf %122, %123 : vector<8x128xf32>
    %125 = math.tanh %119 : vector<8x128xf32>
    %126 = vector.extract_strided_slice %124 {offsets = [0, 0], sizes = [8, 32], strides = [1, 1]} : vector<8x128xf32> to vector<8x32xf32>
    %127 = vector.extract_strided_slice %124 {offsets = [0, 32], sizes = [8, 32], strides = [1, 1]} : vector<8x128xf32> to vector<8x32xf32>
    %128 = vector.extract_strided_slice %125 {offsets = [0, 64], sizes = [8, 32], strides = [1, 1]} : vector<8x128xf32> to vector<8x32xf32>
    %129 = vector.extract_strided_slice %124 {offsets = [0, 96], sizes = [8, 32], strides = [1, 1]} : vector<8x128xf32> to vector<8x32xf32>
    %130 = arith.mulf %127, %114 : vector<8x32xf32>
    %131 = arith.mulf %126, %128 : vector<8x32xf32>
    %132 = arith.addf %130, %131 : vector<8x32xf32>
    %133 = math.tanh %132 : vector<8x32xf32>
    %134 = arith.mulf %129, %133 : vector<8x32xf32>
    %135 = vector.extract_strided_slice %6 {offsets = [56, 0], sizes = [8, 128], strides = [1, 1]} : vector<64x128xf32> to vector<8x128xf32>
    %cst_23 = arith.constant dense<0.000000e+00> : vector<8x128xf32>
    %136 = tpu.matmul %134, %0, %cst_23 {dimension_numbers = #tpu.dot_dimension_numbers<[1], [0], [0], [1], [0, 0, 1, 1], [], []>} : vector<8x32xf32>, vector<32x128xf32>, vector<8x128xf32> -> vector<8x128xf32>
    %137 = arith.addf %135, %136 : vector<8x128xf32>
    %138 = arith.negf %137 : vector<8x128xf32>
    %139 = math.exp %138 : vector<8x128xf32>
    %cst_24 = arith.constant 1.000000e+00 : f32
    %140 = vector.broadcast %cst_24 : f32 to vector<8x128xf32>
    %141 = arith.addf %140, %139 : vector<8x128xf32>
    %142 = arith.divf %140, %141 : vector<8x128xf32>
    %143 = math.tanh %137 : vector<8x128xf32>
    %144 = vector.extract_strided_slice %142 {offsets = [0, 0], sizes = [8, 32], strides = [1, 1]} : vector<8x128xf32> to vector<8x32xf32>
    %145 = vector.extract_strided_slice %142 {offsets = [0, 32], sizes = [8, 32], strides = [1, 1]} : vector<8x128xf32> to vector<8x32xf32>
    %146 = vector.extract_strided_slice %143 {offsets = [0, 64], sizes = [8, 32], strides = [1, 1]} : vector<8x128xf32> to vector<8x32xf32>
    %147 = vector.extract_strided_slice %142 {offsets = [0, 96], sizes = [8, 32], strides = [1, 1]} : vector<8x128xf32> to vector<8x32xf32>
    %148 = arith.mulf %145, %132 : vector<8x32xf32>
    %149 = arith.mulf %144, %146 : vector<8x32xf32>
    %150 = arith.addf %148, %149 : vector<8x32xf32>
    %151 = math.tanh %150 : vector<8x32xf32>
    %152 = arith.mulf %147, %151 : vector<8x32xf32>
    %c0_25 = arith.constant 0 : index
    %c0_26 = arith.constant 0 : index
    %153 = vector.load %arg4[%c0_25, %c0_26] : memref<1x32xf32, #tpu.memory_space<vmem>>, vector<1x32xf32>
    %154 = vector.broadcast %153 : vector<1x32xf32> to vector<8x32xf32>
    %155 = arith.mulf %152, %154 : vector<8x32xf32>
    %cst_27 = arith.constant dense<0.000000e+00> : vector<8xf32>
    %156 = vector.multi_reduction <add>, %155, %cst_27 [1] : vector<8x32xf32> to vector<8xf32>
    %157 = vector.shape_cast %156 : vector<8xf32> to vector<8x1xf32>
    %c0_28 = arith.constant 0 : index
    %c0_29 = arith.constant 0 : index
    %158 = memref.load %arg5[%c0_28, %c0_29] : memref<1x1xf32, #tpu.memory_space<smem>>
    %159 = vector.broadcast %158 : f32 to vector<8x1xf32>
    %160 = arith.addf %157, %159 : vector<8x1xf32>
    %c0_30 = arith.constant 0 : index
    %c0_31 = arith.constant 0 : index
    %161 = vector.load %arg6[%c0_30, %c0_31] : memref<8x1xf32, #tpu.memory_space<vmem>>, vector<8x1xf32>
    tpu.vector_store %arg6[%c0_30, %c0_31], %160 {strides = array<i32>} : memref<8x1xf32, #tpu.memory_space<vmem>>, vector<8x1xf32>,
    return
  }
}

</mosaic_0001>

<llo_original>
// kernel: tpu_custom_call.1
$region0: #{tpu_custom_call.1}
  #allocation0 [shape = 'u32[]', space=smem, size = 0x4, offset = 0x4, fixed_abs, tag = 'smem constant byte address 0x4 - core index']
  #allocation1 [shape = 'u32[72,128]{1,0:T(1,128)}', space=vmem, size = 0x9000, scoped, tag = 'internal scratch']
  #allocation2 [shape = 'f32[1,1]{1,0:T(1,128)S(6)}', space=smem, size = 0x200, scoped, tag = 'scoped memory for tpu_custom_call.1']
  %s0 = inlined_call_operand.vmem [shape: f32[64,4], index: 0, kind: input, shape index: {}]
  %s1 = inlined_call_operand.vmem [shape: f32[4,128], index: 1, kind: input, shape index: {}]
  %s2 = inlined_call_operand.vmem [shape: f32[32,128], index: 2, kind: input, shape index: {}]
  %s3 = inlined_call_operand.vmem [shape: f32[1,128], index: 3, kind: input, shape index: {}]
  %s4 = inlined_call_operand.vmem [shape: f32[1,32], index: 4, kind: input, shape index: {}]
  %s5 = inlined_call_operand.<no memory space> [shape: f32[1,1], index: 5, kind: input, shape index: {}]
  %s6 = inlined_call_operand.vmem [shape: f32[8,1], index: 6, kind: output, shape index: {}]
  %s7 = sld [smem:[#allocation0]]
  $region34: #{tpu_custom_call.1} parent=0
    _
  %s9 = ssub.s32 1, %s7
  %s10 = scalar_select 0, %s9, %s7
  %11 = sst [smem:[#allocation2]] %s5
  // Predicated region
  $region2: #{tpu_custom_call.1} parent=0 // pred_check
    _
  $region3: #{tpu_custom_call.1} parent=0 // pred_check_branch
    %13 = sbr.rel (0) target = $region5
  $region4: #{tpu_custom_call.1} parent=0 // pred_region
    _
  $region5: #{tpu_custom_call.1} parent=0 // pred_fallthru
    _
  // Predicated region
  $region6: #{tpu_custom_call.1} parent=0 // pred_check
    _
  $region7: #{tpu_custom_call.1} parent=0 // pred_check_branch
    %15 = sbr.rel (0) target = $region9
  $region8: #{tpu_custom_call.1} parent=0 // pred_region
    _
  $region9: #{tpu_custom_call.1} parent=0 // pred_fallthru
    _
  // Predicated region
  $region10: #{tpu_custom_call.1} parent=0 // pred_check
    _
  $region11: #{tpu_custom_call.1} parent=0 // pred_check_branch
    %17 = sbr.rel (0) target = $region13
  $region12: #{tpu_custom_call.1} parent=0 // pred_region
    _
  $region13: #{tpu_custom_call.1} parent=0 // pred_fallthru
    _
  // Predicated region
  $region14: #{tpu_custom_call.1} parent=0 // pred_check
    _
  $region15: #{tpu_custom_call.1} parent=0 // pred_check_branch
    %19 = sbr.rel (0) target = $region17
  $region16: #{tpu_custom_call.1} parent=0 // pred_region
    _
  $region17: #{tpu_custom_call.1} parent=0 // pred_fallthru
    _
  // Predicated region
  $region18: #{tpu_custom_call.1} parent=0 // pred_check
    _
  $region19: #{tpu_custom_call.1} parent=0 // pred_check_branch
    %21 = sbr.rel (0) target = $region21
  $region20: #{tpu_custom_call.1} parent=0 // pred_region
    _
  $region21: #{tpu_custom_call.1} parent=0 // pred_fallthru
    _
  // Predicated region
  $region22: #{tpu_custom_call.1} parent=0 // pred_check
    _
  $region23: #{tpu_custom_call.1} parent=0 // pred_check_branch
    %23 = sbr.rel (0) target = $region25
  $region24: #{tpu_custom_call.1} parent=0 // pred_region
    _
  $region25: #{tpu_custom_call.1} parent=0 // pred_fallthru
    _
  %v24 = vld [vmem:[%s2] sm:$0xff]
  %v25 = vld [vmem:[%s2 + $0x8] sm:$0xff]
  %v26 = vld [vmem:[%s2 + $0x10] sm:$0xff]
  %v27 = vld [vmem:[%s2 + $0x18] sm:$0xff]
  %v28 = vld [vmem:[%s0] sm:$0xff]
  %v29 = vld [vmem:[%s0 + $0x8] sm:$0xff]
  %v30 = vld [vmem:[%s0 + $0x10] sm:$0xff]
  %v31 = vld [vmem:[%s0 + $0x18] sm:$0xff]
  %v32 = vld [vmem:[%s0 + $0x20] sm:$0xff]
  %v33 = vld [vmem:[%s0 + $0x28] sm:$0xff]
  %v34 = vld [vmem:[%s0 + $0x30] sm:$0xff]
  %v35 = vld [vmem:[%s0 + $0x38] sm:$0xff]
  %v36 = vld [vmem:[%s1] sm:$0xf]
  %v37 = vld [vmem:[%s3] sm:$0x1]
  %v39 = vperm.slane %v37, 0
  %vm41 = vcmask 31744
  %v43 = vsel %vm41, %v28, 0
  %v46 = vsel %vm41, %v29, 0
  %v49 = vsel %vm41, %v30, 0
  %v52 = vsel %vm41, %v31, 0
  %v55 = vsel %vm41, %v32, 0
  %v58 = vsel %vm41, %v33, 0
  %v61 = vsel %vm41, %v34, 0
  %v64 = vsel %vm41, %v35, 0
  %vm66 = vcmask 1043456
  %v68 = vsel %vm66, %v36, 0
  %70 = vmatpush.msra.mxu0 0.0
  %71 = vmatpush.msra.mxu0 0.0
  %72 = vmatpush.msra.mxu0 0.0
  %73 = vmatpush.msra.mxu0 0.0
  %74 = vmatpush.msra.mxu0 0.0
  %75 = vmatpush.msra.mxu0 0.0
  %76 = vmatpush.msra.mxu0 0.0
  %77 = vmatpush.msra.mxu0 0.0
  %78 = vmatpush.msra.mxu0 0.0
  %79 = vmatpush.msra.mxu0 0.0
  %80 = vmatpush.msra.mxu0 0.0
  %81 = vmatpush.msra.mxu0 0.0
  %82 = vmatpush.msra.mxu0 0.0
  %83 = vmatpush.msra.mxu0 0.0
  %84 = vmatpush.msra.mxu0 0.0
  %85 = vmatpush.msra.mxu0 %v68
  %86 = vmatmul.f32.gmra.mxu0 %v43
  %v87 = vpop.f32.mrf.mxu0
  %v88 = vadd.f32 %v39, %v87
  %89 = vmatmul.f32.gmra.mxu0 %v46
  %v90 = vpop.f32.mrf.mxu0
  %v91 = vadd.f32 %v39, %v90
  %92 = vmatmul.f32.gmra.mxu0 %v49
  %v93 = vpop.f32.mrf.mxu0
  %v94 = vadd.f32 %v39, %v93
  %95 = vmatmul.f32.gmra.mxu0 %v52
  %v96 = vpop.f32.mrf.mxu0
  %v97 = vadd.f32 %v39, %v96
  %98 = vmatmul.f32.gmra.mxu0 %v55
  %v99 = vpop.f32.mrf.mxu0
  %v100 = vadd.f32 %v39, %v99
  %101 = vmatmul.f32.gmra.mxu0 %v58
  %v102 = vpop.f32.mrf.mxu0
  %v103 = vadd.f32 %v39, %v102
  %104 = vmatmul.f32.gmra.mxu0 %v61
  %v105 = vpop.f32.mrf.mxu0
  %v106 = vadd.f32 %v39, %v105
  %107 = vmatmul.f32.gmra.mxu0 %v64
  %v108 = vpop.f32.mrf.mxu0
  %v109 = vadd.f32 %v39, %v108
  %110 = vdwg.mxu0
  %vm111 = vcmask 261120
  %v113 = vsel %vm111, 0.0, 0
  %115 = vmatpush.msra.mxu0 0.0
  %116 = vmatpush.msra.mxu0 0.0
  %117 = vmatpush.msra.mxu0 0.0
  %118 = vmatpush.msra.mxu0 0.0
  %119 = vmatpush.msra.mxu0 0.0
  %120 = vmatpush.msra.mxu0 0.0
  %121 = vmatpush.msra.mxu0 0.0
  %122 = vmatpush.msra.mxu0 0.0
  %123 = vmatpush.msra.mxu0 0.0
  %124 = vmatpush.msra.mxu0 0.0
  %125 = vmatpush.msra.mxu0 0.0
  %126 = vmatpush.msra.mxu0 0.0
  %127 = vmatpush.msra.mxu0 %v27
  %128 = vmatpush.msra.mxu0 %v26
  %129 = vmatpush.msra.mxu0 %v25
  %130 = vmatpush.msra.mxu0 %v24
  %131 = vmatmul.f32.gmra.mxu0 %v113
  %v132 = vpop.f32.mrf.mxu0
  %v133 = vadd.f32 0.0, %v132
  %134 = vdwg.mxu0
  %v135 = vadd.f32 %v88, %v133
  %v136 = vxor.u32 %v135, 2147483648
  %v137 = vmul.f32 %v136, 1.442695
  %v138 = vpow.pop %v137
  %v139 = vadd.f32 %v138, 1.0
  %v140 = vrcp.pop %v139
  %v141 = vmul.f32 %v139, %v140
  %v142 = vsub.f32 1.0, %v141
  %v143 = vmul.f32 %v140, %v142
  %v144 = vadd.f32 %v140, %v143
  %vm145 = vweird.f32 %v139
  %vm146 = vweird.f32 %v140
  %vm147 = vmor %vm145, %vm146
  %v148 = vsel %vm147, %v140, %v144
  %v149 = vand.u32 2147483647, %v139
  %vm150 = vcmp.eq.f32.partialorder %v149, 8.507059e+37
  %v151 = vand.u32 %v139, 2147483648
  %v152 = vor.u32 1.1754944e-38, %v151
  %v153 = vsel %vm150, %v152, %v148
  %v154 = vmul.f32 1.0, %v153
  %v155 = vtanh.pop %v135
  %v156 = vmul.f32 %v154, 0.0
  %158 = vrot.lane.b32.xlu0 %v155, 64
  %v159 = vpop.permute.xlu0 %158
  %v161 = vmul.f32 %v154, %v159
  %163 = vrot.lane.b32.xlu0 %v161, 32
  %v164 = vpop.permute.xlu0 %163
  %v166 = vadd.f32 %v156, %v164
  %v167 = vtanh.pop %v166
  %169 = vrot.lane.b32.xlu0 %v167, 64
  %v170 = vpop.permute.xlu0 %169
  %v172 = vmul.f32 %v154, %v170
  %174 = vrot.lane.b32.xlu0 %v172, 32
  %v175 = vpop.permute.xlu0 %174
  %v176 = vsel %vm111, %v175, 0
  %178 = vmatpush.msra.mxu0 0.0
  %179 = vmatpush.msra.mxu0 0.0
  %180 = vmatpush.msra.mxu0 0.0
  %181 = vmatpush.msra.mxu0 0.0
  %182 = vmatpush.msra.mxu0 0.0
  %183 = vmatpush.msra.mxu0 0.0
  %184 = vmatpush.msra.mxu0 0.0
  %185 = vmatpush.msra.mxu0 0.0
  %186 = vmatpush.msra.mxu0 0.0
  %187 = vmatpush.msra.mxu0 0.0
  %188 = vmatpush.msra.mxu0 0.0
  %189 = vmatpush.msra.mxu0 0.0
  %190 = vmatpush.msra.mxu0 %v27
  %191 = vmatpush.msra.mxu0 %v26
  %192 = vmatpush.msra.mxu0 %v25
  %193 = vmatpush.msra.mxu0 %v24
  %194 = vmatmul.f32.gmra.mxu0 %v176
  %v195 = vpop.f32.mrf.mxu0
  %v196 = vadd.f32 0.0, %v195
  %197 = vdwg.mxu0
  %v198 = vadd.f32 %v91, %v196
  %v199 = vxor.u32 %v198, 2147483648
  %v200 = vmul.f32 %v199, 1.442695
  %v201 = vpow.pop %v200
  %v202 = vadd.f32 %v201, 1.0
  %v203 = vrcp.pop %v202
  %v204 = vmul.f32 %v202, %v203
  %v205 = vsub.f32 1.0, %v204
  %v206 = vmul.f32 %v203, %v205
  %v207 = vadd.f32 %v203, %v206
  %vm208 = vweird.f32 %v202
  %vm209 = vweird.f32 %v203
  %vm210 = vmor %vm208, %vm209
  %v211 = vsel %vm210, %v203, %v207
  %v212 = vand.u32 2147483647, %v202
  %vm213 = vcmp.eq.f32.partialorder %v212, 8.507059e+37
  %v214 = vand.u32 %v202, 2147483648
  %v215 = vor.u32 1.1754944e-38, %v214
  %v216 = vsel %vm213, %v215, %v211
  %v217 = vmul.f32 1.0, %v216
  %v218 = vtanh.pop %v198
  %v219 = vmul.f32 %v217, %v166
  %221 = vrot.lane.b32.xlu0 %v218, 64
  %v222 = vpop.permute.xlu0 %221
  %v224 = vmul.f32 %v217, %v222
  %226 = vrot.lane.b32.xlu0 %v224, 32
  %v227 = vpop.permute.xlu0 %226
  %v229 = vadd.f32 %v219, %v227
  %v230 = vtanh.pop %v229
  %232 = vrot.lane.b32.xlu0 %v230, 64
  %v233 = vpop.permute.xlu0 %232
  %v235 = vmul.f32 %v217, %v233
  %237 = vrot.lane.b32.xlu0 %v235, 32
  %v238 = vpop.permute.xlu0 %237
  %v239 = vsel %vm111, %v238, 0
  %241 = vmatpush.msra.mxu0 0.0
  %242 = vmatpush.msra.mxu0 0.0
  %243 = vmatpush.msra.mxu0 0.0
  %244 = vmatpush.msra.mxu0 0.0
  %245 = vmatpush.msra.mxu0 0.0
  %246 = vmatpush.msra.mxu0 0.0
  %247 = vmatpush.msra.mxu0 0.0
  %248 = vmatpush.msra.mxu0 0.0
  %249 = vmatpush.msra.mxu0 0.0
  %250 = vmatpush.msra.mxu0 0.0
  %251 = vmatpush.msra.mxu0 0.0
  %252 = vmatpush.msra.mxu0 0.0
  %253 = vmatpush.msra.mxu0 %v27
  %254 = vmatpush.msra.mxu0 %v26
  %255 = vmatpush.msra.mxu0 %v25
  %256 = vmatpush.msra.mxu0 %v24
  %257 = vmatmul.f32.gmra.mxu0 %v239
  %v258 = vpop.f32.mrf.mxu0
  %v259 = vadd.f32 0.0, %v258
  %260 = vdwg.mxu0
  %v261 = vadd.f32 %v94, %v259
  %v262 = vxor.u32 %v261, 2147483648
  %v263 = vmul.f32 %v262, 1.442695
  %v264 = vpow.pop %v263
  %v265 = vadd.f32 %v264, 1.0
  %v266 = vrcp.pop %v265
  %v267 = vmul.f32 %v265, %v266
  %v268 = vsub.f32 1.0, %v267
  %v269 = vmul.f32 %v266, %v268
  %v270 = vadd.f32 %v266, %v269
  %vm271 = vweird.f32 %v265
  %vm272 = vweird.f32 %v266
  %vm273 = vmor %vm271, %vm272
  %v274 = vsel %vm273, %v266, %v270
  %v275 = vand.u32 2147483647, %v265
  %vm276 = vcmp.eq.f32.partialorder %v275, 8.507059e+37
  %v277 = vand.u32 %v265, 2147483648
  %v278 = vor.u32 1.1754944e-38, %v277
  %v279 = vsel %vm276, %v278, %v274
  %v280 = vmul.f32 1.0, %v279
  %v281 = vtanh.pop %v261
  %v282 = vmul.f32 %v280, %v229
  %284 = vrot.lane.b32.xlu0 %v281, 64
  %v285 = vpop.permute.xlu0 %284
  %v287 = vmul.f32 %v280, %v285
  %289 = vrot.lane.b32.xlu0 %v287, 32
  %v290 = vpop.permute.xlu0 %289
  %v292 = vadd.f32 %v282, %v290
  %v293 = vtanh.pop %v292
  %295 = vrot.lane.b32.xlu0 %v293, 64
  %v296 = vpop.permute.xlu0 %295
  %v298 = vmul.f32 %v280, %v296
  %300 = vrot.lane.b32.xlu0 %v298, 32
  %v301 = vpop.permute.xlu0 %300
  %v302 = vsel %vm111, %v301, 0
  %304 = vmatpush.msra.mxu0 0.0
  %305 = vmatpush.msra.mxu0 0.0
  %306 = vmatpush.msra.mxu0 0.0
  %307 = vmatpush.msra.mxu0 0.0
  %308 = vmatpush.msra.mxu0 0.0
  %309 = vmatpush.msra.mxu0 0.0
  %310 = vmatpush.msra.mxu0 0.0
  %311 = vmatpush.msra.mxu0 0.0
  %312 = vmatpush.msra.mxu0 0.0
  %313 = vmatpush.msra.mxu0 0.0
  %314 = vmatpush.msra.mxu0 0.0
  %315 = vmatpush.msra.mxu0 0.0
  %316 = vmatpush.msra.mxu0 %v27
  %317 = vmatpush.msra.mxu0 %v26
  %318 = vmatpush.msra.mxu0 %v25
  %319 = vmatpush.msra.mxu0 %v24
  %320 = vmatmul.f32.gmra.mxu0 %v302
  %v321 = vpop.f32.mrf.mxu0
  %v322 = vadd.f32 0.0, %v321
  %323 = vdwg.mxu0
  %v324 = vadd.f32 %v97, %v322
  %v325 = vxor.u32 %v324, 2147483648
  %v326 = vmul.f32 %v325, 1.442695
  %v327 = vpow.pop %v326
  %v328 = vadd.f32 %v327, 1.0
  %v329 = vrcp.pop %v328
  %v330 = vmul.f32 %v328, %v329
  %v331 = vsub.f32 1.0, %v330
  %v332 = vmul.f32 %v329, %v331
  %v333 = vadd.f32 %v329, %v332
  %vm334 = vweird.f32 %v328
  %vm335 = vweird.f32 %v329
  %vm336 = vmor %vm334, %vm335
  %v337 = vsel %vm336, %v329, %v333
  %v338 = vand.u32 2147483647, %v328
  %vm339 = vcmp.eq.f32.partialorder %v338, 8.507059e+37
  %v340 = vand.u32 %v328, 2147483648
  %v341 = vor.u32 1.1754944e-38, %v340
  %v342 = vsel %vm339, %v341, %v337
  %v343 = vmul.f32 1.0, %v342
  %v344 = vtanh.pop %v324
  %v345 = vmul.f32 %v343, %v292
  %347 = vrot.lane.b32.xlu0 %v344, 64
  %v348 = vpop.permute.xlu0 %347
  %v350 = vmul.f32 %v343, %v348
  %352 = vrot.lane.b32.xlu0 %v350, 32
  %v353 = vpop.permute.xlu0 %352
  %v355 = vadd.f32 %v345, %v353
  %v356 = vtanh.pop %v355
  %358 = vrot.lane.b32.xlu0 %v356, 64
  %v359 = vpop.permute.xlu0 %358
  %v361 = vmul.f32 %v343, %v359
  %363 = vrot.lane.b32.xlu0 %v361, 32
  %v364 = vpop.permute.xlu0 %363
  %v365 = vsel %vm111, %v364, 0
  %367 = vmatpush.msra.mxu0 0.0
  %368 = vmatpush.msra.mxu0 0.0
  %369 = vmatpush.msra.mxu0 0.0
  %370 = vmatpush.msra.mxu0 0.0
  %371 = vmatpush.msra.mxu0 0.0
  %372 = vmatpush.msra.mxu0 0.0
  %373 = vmatpush.msra.mxu0 0.0
  %374 = vmatpush.msra.mxu0 0.0
  %375 = vmatpush.msra.mxu0 0.0
  %376 = vmatpush.msra.mxu0 0.0
  %377 = vmatpush.msra.mxu0 0.0
  %378 = vmatpush.msra.mxu0 0.0
  %379 = vmatpush.msra.mxu0 %v27
  %380 = vmatpush.msra.mxu0 %v26
  %381 = vmatpush.msra.mxu0 %v25
  %382 = vmatpush.msra.mxu0 %v24
  %383 = vmatmul.f32.gmra.mxu0 %v365
  %v384 = vpop.f32.mrf.mxu0
  %v385 = vadd.f32 0.0, %v384
  %386 = vdwg.mxu0
  %v387 = vadd.f32 %v100, %v385
  %v388 = vxor.u32 %v387, 2147483648
  %v389 = vmul.f32 %v388, 1.442695
  %v390 = vpow.pop %v389
  %v391 = vadd.f32 %v390, 1.0
  %v392 = vrcp.pop %v391
  %v393 = vmul.f32 %v391, %v392
  %v394 = vsub.f32 1.0, %v393
  %v395 = vmul.f32 %v392, %v394
  %v396 = vadd.f32 %v392, %v395
  %vm397 = vweird.f32 %v391
  %vm398 = vweird.f32 %v392
  %vm399 = vmor %vm397, %vm398
  %v400 = vsel %vm399, %v392, %v396
  %v401 = vand.u32 2147483647, %v391
  %vm402 = vcmp.eq.f32.partialorder %v401, 8.507059e+37
  %v403 = vand.u32 %v391, 2147483648
  %v404 = vor.u32 1.1754944e-38, %v403
  %v405 = vsel %vm402, %v404, %v400
  %v406 = vmul.f32 1.0, %v405
  %v407 = vtanh.pop %v387
  %v408 = vmul.f32 %v406, %v355
  %410 = vrot.lane.b32.xlu0 %v407, 64
  %v411 = vpop.permute.xlu0 %410
  %v413 = vmul.f32 %v406, %v411
  %415 = vrot.lane.b32.xlu0 %v413, 32
  %v416 = vpop.permute.xlu0 %415
  %v418 = vadd.f32 %v408, %v416
  %v419 = vtanh.pop %v418
  %421 = vrot.lane.b32.xlu0 %v419, 64
  %v422 = vpop.permute.xlu0 %421
  %v424 = vmul.f32 %v406, %v422
  %426 = vrot.lane.b32.xlu0 %v424, 32
  %v427 = vpop.permute.xlu0 %426
  %v428 = vsel %vm111, %v427, 0
  %430 = vmatpush.msra.mxu0 0.0
  %431 = vmatpush.msra.mxu0 0.0
  %432 = vmatpush.msra.mxu0 0.0
  %433 = vmatpush.msra.mxu0 0.0
  %434 = vmatpush.msra.mxu0 0.0
  %435 = vmatpush.msra.mxu0 0.0
  %436 = vmatpush.msra.mxu0 0.0
  %437 = vmatpush.msra.mxu0 0.0
  %438 = vmatpush.msra.mxu0 0.0
  %439 = vmatpush.msra.mxu0 0.0
  %440 = vmatpush.msra.mxu0 0.0
  %441 = vmatpush.msra.mxu0 0.0
  %442 = vmatpush.msra.mxu0 %v27
  %443 = vmatpush.msra.mxu0 %v26
  %444 = vmatpush.msra.mxu0 %v25
  %445 = vmatpush.msra.mxu0 %v24
  %446 = vmatmul.f32.gmra.mxu0 %v428
  %v447 = vpop.f32.mrf.mxu0
  %v448 = vadd.f32 0.0, %v447
  %449 = vdwg.mxu0
  %v450 = vadd.f32 %v103, %v448
  %v451 = vxor.u32 %v450, 2147483648
  %v452 = vmul.f32 %v451, 1.442695
  %v453 = vpow.pop %v452
  %v454 = vadd.f32 %v453, 1.0
  %v455 = vrcp.pop %v454
  %v456 = vmul.f32 %v454, %v455
  %v457 = vsub.f32 1.0, %v456
  %v458 = vmul.f32 %v455, %v457
  %v459 = vadd.f32 %v455, %v458
  %vm460 = vweird.f32 %v454
  %vm461 = vweird.f32 %v455
  %vm462 = vmor %vm460, %vm461
  %v463 = vsel %vm462, %v455, %v459
  %v464 = vand.u32 2147483647, %v454
  %vm465 = vcmp.eq.f32.partialorder %v464, 8.507059e+37
  %v466 = vand.u32 %v454, 2147483648
  %v467 = vor.u32 1.1754944e-38, %v466
  %v468 = vsel %vm465, %v467, %v463
  %v469 = vmul.f32 1.0, %v468
  %v470 = vtanh.pop %v450
  %v471 = vmul.f32 %v469, %v418
  %473 = vrot.lane.b32.xlu0 %v470, 64
  %v474 = vpop.permute.xlu0 %473
  %v476 = vmul.f32 %v469, %v474
  %478 = vrot.lane.b32.xlu0 %v476, 32
  %v479 = vpop.permute.xlu0 %478
  %v481 = vadd.f32 %v471, %v479
  %v482 = vtanh.pop %v481
  %484 = vrot.lane.b32.xlu0 %v482, 64
  %v485 = vpop.permute.xlu0 %484
  %v487 = vmul.f32 %v469, %v485
  %489 = vrot.lane.b32.xlu0 %v487, 32
  %v490 = vpop.permute.xlu0 %489
  %v491 = vsel %vm111, %v490, 0
  %493 = vmatpush.msra.mxu0 0.0
  %494 = vmatpush.msra.mxu0 0.0
  %495 = vmatpush.msra.mxu0 0.0
  %496 = vmatpush.msra.mxu0 0.0
  %497 = vmatpush.msra.mxu0 0.0
  %498 = vmatpush.msra.mxu0 0.0
  %499 = vmatpush.msra.mxu0 0.0
  %500 = vmatpush.msra.mxu0 0.0
  %501 = vmatpush.msra.mxu0 0.0
  %502 = vmatpush.msra.mxu0 0.0
  %503 = vmatpush.msra.mxu0 0.0
  %504 = vmatpush.msra.mxu0 0.0
  %505 = vmatpush.msra.mxu0 %v27
  %506 = vmatpush.msra.mxu0 %v26
  %507 = vmatpush.msra.mxu0 %v25
  %508 = vmatpush.msra.mxu0 %v24
  %509 = vmatmul.f32.gmra.mxu0 %v491
  %v510 = vpop.f32.mrf.mxu0
  %v511 = vadd.f32 0.0, %v510
  %512 = vdwg.mxu0
  %v513 = vadd.f32 %v106, %v511
  %v514 = vxor.u32 %v513, 2147483648
  %v515 = vmul.f32 %v514, 1.442695
  %v516 = vpow.pop %v515
  %v517 = vadd.f32 %v516, 1.0
  %v518 = vrcp.pop %v517
  %v519 = vmul.f32 %v517, %v518
  %v520 = vsub.f32 1.0, %v519
  %v521 = vmul.f32 %v518, %v520
  %v522 = vadd.f32 %v518, %v521
  %vm523 = vweird.f32 %v517
  %vm524 = vweird.f32 %v518
  %vm525 = vmor %vm523, %vm524
  %v526 = vsel %vm525, %v518, %v522
  %v527 = vand.u32 2147483647, %v517
  %vm528 = vcmp.eq.f32.partialorder %v527, 8.507059e+37
  %v529 = vand.u32 %v517, 2147483648
  %v530 = vor.u32 1.1754944e-38, %v529
  %v531 = vsel %vm528, %v530, %v526
  %v532 = vmul.f32 1.0, %v531
  %v533 = vtanh.pop %v513
  %v534 = vmul.f32 %v532, %v481
  %536 = vrot.lane.b32.xlu0 %v533, 64
  %v537 = vpop.permute.xlu0 %536
  %v539 = vmul.f32 %v532, %v537
  %541 = vrot.lane.b32.xlu0 %v539, 32
  %v542 = vpop.permute.xlu0 %541
  %v544 = vadd.f32 %v534, %v542
  %v545 = vtanh.pop %v544
  %547 = vrot.lane.b32.xlu0 %v545, 64
  %v548 = vpop.permute.xlu0 %547
  %v550 = vmul.f32 %v532, %v548
  %552 = vrot.lane.b32.xlu0 %v550, 32
  %v553 = vpop.permute.xlu0 %552
  %v554 = vsel %vm111, %v553, 0
  %556 = vmatpush.msra.mxu0 0.0
  %557 = vmatpush.msra.mxu0 0.0
  %558 = vmatpush.msra.mxu0 0.0
  %559 = vmatpush.msra.mxu0 0.0
  %560 = vmatpush.msra.mxu0 0.0
  %561 = vmatpush.msra.mxu0 0.0
  %562 = vmatpush.msra.mxu0 0.0
  %563 = vmatpush.msra.mxu0 0.0
  %564 = vmatpush.msra.mxu0 0.0
  %565 = vmatpush.msra.mxu0 0.0
  %566 = vmatpush.msra.mxu0 0.0
  %567 = vmatpush.msra.mxu0 0.0
  %568 = vmatpush.msra.mxu0 %v27
  %569 = vmatpush.msra.mxu0 %v26
  %570 = vmatpush.msra.mxu0 %v25
  %571 = vmatpush.msra.mxu0 %v24
  %572 = vmatmul.f32.gmra.mxu0 %v554
  %v573 = vpop.f32.mrf.mxu0
  %v574 = vadd.f32 0.0, %v573
  %575 = vdwg.mxu0
  %v576 = vadd.f32 %v109, %v574
  %v577 = vxor.u32 %v576, 2147483648
  %v578 = vmul.f32 %v577, 1.442695
  %v579 = vpow.pop %v578
  %v580 = vadd.f32 %v579, 1.0
  %v581 = vrcp.pop %v580
  %v582 = vmul.f32 %v580, %v581
  %v583 = vsub.f32 1.0, %v582
  %v584 = vmul.f32 %v581, %v583
  %v585 = vadd.f32 %v581, %v584
  %vm586 = vweird.f32 %v580
  %vm587 = vweird.f32 %v581
  %vm588 = vmor %vm586, %vm587
  %v589 = vsel %vm588, %v581, %v585
  %v590 = vand.u32 2147483647, %v580
  %vm591 = vcmp.eq.f32.partialorder %v590, 8.507059e+37
  %v592 = vand.u32 %v580, 2147483648
  %v593 = vor.u32 1.1754944e-38, %v592
  %v594 = vsel %vm591, %v593, %v589
  %v595 = vmul.f32 1.0, %v594
  %v596 = vtanh.pop %v576
  %v597 = vmul.f32 %v595, %v544
  %599 = vrot.lane.b32.xlu0 %v596, 64
  %v600 = vpop.permute.xlu0 %599
  %v602 = vmul.f32 %v595, %v600
  %604 = vrot.lane.b32.xlu0 %v602, 32
  %v605 = vpop.permute.xlu0 %604
  %v607 = vadd.f32 %v597, %v605
  %v608 = vtanh.pop %v607
  %610 = vrot.lane.b32.xlu0 %v608, 64
  %v611 = vpop.permute.xlu0 %610
  %v613 = vmul.f32 %v595, %v611
  %v614 = vld [vmem:[%s4] sm:$0x1]
  %v616 = vperm.slane %v614, 0
  %617 = vrot.lane.b32.xlu0 %v616, 96
  %v618 = vpop.permute.xlu0 %617
  %v620 = vmul.f32 %v613, %v618
  %622 = vrot.lane.b32.xlu0 %v620, 32
  %v623 = vpop.permute.xlu0 %622
  %v625 = vsel %vm111, %v623, 0.0
  %626 = vadd.xlane.f32.xlu0 %v625
  %v627 = vpop.xlane.xlu0 %626
  %s628 = sld [smem:[#allocation2]]
  %v629 = vstv %s628
  %v630 = vadd.f32 %v627, %v629
  %vm631 = vcmask 7168
  %632 = vst.msk [vmem:[%s6] sm:$0xff] %vm631, %v630
  // Predicated region
  $region26: #{tpu_custom_call.1} parent=0 // pred_check
    _
  $region27: #{tpu_custom_call.1} parent=0 // pred_check_branch
    %634 = sbr.rel (0) target = $region29
  $region28: #{tpu_custom_call.1} parent=0 // pred_region
    _
  $region29: #{tpu_custom_call.1} parent=0 // pred_fallthru
    _
  // Predicated region
  $region30: #{tpu_custom_call.1} parent=0 // pred_check
    _
  $region31: #{tpu_custom_call.1} parent=0 // pred_check_branch
    %636 = sbr.rel (0) target = $region33
  $region32: #{tpu_custom_call.1} parent=0 // pred_region
    _
  $region33: #{tpu_custom_call.1} parent=0 // pred_fallthru
    _

</llo_original>
